<compile_context>
chip_gen: v6e
topology: v6e:2x2x1
jax: 0.10.0
libtpu: 0.0.40
codegen_flags: <defaults>
</compile_context>

<pallas_src>
import functools

import jax
import jax.numpy as jnp
from jax.experimental import pallas as pl
from jax.experimental.pallas import tpu as pltpu


def _center_reg_mutex_kernel(x_ref, c_ref, csq_ref, lab_ref, out_ref,
                             *, batch, block_b):
    """mutex_label=True: full (TB, C) distmat, column mask from labels."""
    i = pl.program_id(0)

    @pl.when(i == 0)
    def _init():
        out_ref[0, 0] = jnp.float32(0.0)

    x = x_ref[...].astype(jnp.float32)          # (TB, D)
    c = c_ref[...].astype(jnp.float32)          # (C, D) resident across grid

    x_sq = jnp.sum(x * x, axis=1, keepdims=True)                     # (TB, 1)
    # Contract over feat_dim directly -- no c.T / relayout before the MXU push.
    xc = jax.lax.dot_general(
        x, c, dimension_numbers=(((1,), (1,)), ((), ())),
        preferred_element_type=jnp.float32)                          # (TB, C)
    distmat = x_sq + csq_ref[...] - 2.0 * xc                         # (TB, C)

    # (1, C) lane-major boolean column mask; sublane broadcast is free (VPU select).
    col_mask = lab_ref[...] > 0
    contrib = jnp.where(col_mask,
                        jnp.clip(distmat, 1e-12, 1e12),
                        jnp.float32(1e-12))

    # Zero out padded rows of the last (possibly partial) batch tile.
    row_ids = i * block_b + jax.lax.broadcasted_iota(
        jnp.int32, (contrib.shape[0], 1), 0)
    contrib = jnp.where(row_ids < batch, contrib, 0.0)

    out_ref[0, 0] += jnp.sum(contrib)


def _center_reg_gather_kernel(x_ref, csel_ref, out_ref, *, batch, block_b):
    """mutex_label=False: per-row distance to the pre-gathered center (O(B*D))."""
    i = pl.program_id(0)

    @pl.when(i == 0)
    def _init():
        out_ref[0, 0] = jnp.float32(0.0)

    x = x_ref[...].astype(jnp.float32)          # (TB, D)
    cs = csel_ref[...].astype(jnp.float32)      # (TB, D) = centers[labels] tile

    # ||x_i||^2 + ||c_{l_i}||^2 - 2 <x_i, c_{l_i}> per row (lane reduction only).
    d = jnp.sum(x * x + cs * cs - 2.0 * x * cs, axis=1, keepdims=True)  # (TB, 1)
    d = jnp.clip(d, 1e-12, 1e12)

    row_ids = i * block_b + jax.lax.broadcasted_iota(jnp.int32, (d.shape[0], 1), 0)
    d = jnp.where(row_ids < batch, d, 0.0)

    out_ref[0, 0] += jnp.sum(d)


def center_regressor_loss(x, labels, centers, *, mutex_label=True, block_b=None):
    b, d = x.shape
    c, d2 = centers.shape
    assert d == d2
    x = x.astype(jnp.float32)
    centers = centers.astype(jnp.float32)

    # Batch tile: biggest that comfortably fits VMEM (v7x has 64 MiB physical /
    # 32 MiB scoped; 512 x D f32 double-buffered + (512, C) intermediates is a
    # few MiB for typical center-loss D, C).
    if block_b is None:
        block_b = b if b <= 512 else 512
    if block_b != b:
        assert block_b % 8 == 0, "batch tile must be a multiple of 8 (or the full batch)"
    grid = (pl.cdiv(b, block_b),)
    # Batch axis accumulates into one scalar -> "arbitrary".
    compiler_params = pltpu.CompilerParams(dimension_semantics=("arbitrary",))

    if mutex_label:
        # PyTorch quirk: (B, C) * (B,) broadcasts the mask over the last axis,
        # which only type-checks when num_classes == batch_size.
        assert c == b, "mutex_label=True requires num_classes == batch_size"
        c_sq = jnp.sum(centers * centers, axis=1)[None, :]        # (1, C) lane-major
        lab_row = labels.reshape(1, c).astype(jnp.int32)          # (1, C) lane-major
        kernel = functools.partial(_center_reg_mutex_kernel,
                                   batch=b, block_b=block_b)
        total = pl.pallas_call(
            kernel,
            out_shape=jax.ShapeDtypeStruct((1, 1), jnp.float32),
            grid=grid,
            in_specs=[
                pl.BlockSpec((block_b, d), lambda i: (i, 0)),   # x tile
                pl.BlockSpec((c, d), lambda i: (0, 0)),         # centers (resident)
                pl.BlockSpec((1, c), lambda i: (0, 0)),         # ||c||^2 row
                pl.BlockSpec((1, c), lambda i: (0, 0)),         # labels row
            ],
            out_specs=pl.BlockSpec(memory_space=pltpu.MemorySpace.SMEM),
            compiler_params=compiler_params,
        )(x, centers, c_sq, lab_row)[0, 0]
    else:
        # Only distmat[i, labels[i]] survives the one-hot mask: gather the
        # per-row center in the wrapper (cheap XLA gather) and do O(B*D) work.
        c_sel = centers[labels.astype(jnp.int32)]                 # (B, D)
        kernel = functools.partial(_center_reg_gather_kernel,
                                   batch=b, block_b=block_b)
        active = pl.pallas_call(
            kernel,
            out_shape=jax.ShapeDtypeStruct((1, 1), jnp.float32),
            grid=grid,
            in_specs=[
                pl.BlockSpec((block_b, d), lambda i: (i, 0)),
                pl.BlockSpec((block_b, d), lambda i: (i, 0)),
            ],
            out_specs=pl.BlockSpec(memory_space=pltpu.MemorySpace.SMEM),
            compiler_params=compiler_params,
        )(x, c_sel)[0, 0]
        # Each masked-out entry is clip(0, 1e-12, 1e12) == 1e-12; B*(C-1) of them.
        total = active + jnp.float32(b * (c - 1)) * jnp.float32(1e-12)

    mean = total / (b * c)              # torch .mean() over all B*C entries
    return mean / b / 512.0


def _reference(x, labels, centers, *, mutex_label=True):
    c = centers.shape[0]
    distmat = (jnp.sum(x ** 2, 1, keepdims=True)
               + jnp.sum(centers ** 2, 1, keepdims=True).T
               - 2.0 * x @ centers.T)
    if mutex_label:
        mask = (labels > 0).astype(jnp.float32)       # (B,), broadcast on last dim
    else:
        mask = (labels[:, None] == jnp.arange(c)[None, :]).astype(jnp.float32)
    dist = jnp.clip(distmat * mask, 1e-12, 1e12)
    return dist.mean() / x.shape[0] / 512.0


if __name__ == "__main__":
    key = jax.random.PRNGKey(0)
    k1, k2, k3, k4, k5 = jax.random.split(key, 5)

    feat_dim, num_classes = 32, 16
    # centers ~ torch.randn(num_classes, feat_dim), deterministic synthetic init
    centers = jax.random.normal(k1, (num_classes, feat_dim), dtype=jnp.float32)

    # --- mutex_label=True (labels in {-1, +1}); requires batch == num_classes ---
    batch = num_classes
    x = jax.random.normal(k2, (batch, feat_dim), dtype=jnp.float32)
    labels_pm1 = jnp.where(jax.random.bernoulli(k3, 0.5, (batch,)), 1, -1).astype(jnp.int32)
    loss1 = center_regressor_loss(x, labels_pm1, centers, mutex_label=True, block_b=8)
    jax.block_until_ready(loss1)
    ref1 = _reference(x, labels_pm1.astype(jnp.float32), centers, mutex_label=True)
    assert jnp.allclose(loss1, ref1, rtol=1e-5, atol=1e-7), (loss1, ref1)

    # --- mutex_label=False (class-index labels); batch not a multiple of the
    #     tile so the last block exercises the padded-row masking path ---
    batch2 = 20
    x2 = jax.random.normal(k4, (batch2, feat_dim), dtype=jnp.float32)
    labels_cls = jax.random.randint(k5, (batch2,), 0, num_classes, dtype=jnp.int32)
    loss2 = center_regressor_loss(x2, labels_cls, centers, mutex_label=False, block_b=8)
    jax.block_until_ready(loss2)
    ref2 = _reference(x2, labels_cls, centers, mutex_label=False)
    assert jnp.allclose(loss2, ref2, rtol=1e-5, atol=1e-7), (loss2, ref2)

    print("KERNEL_OK")
</pallas_src>

<mosaic_0001>
module attributes {stable_mosaic.version = 11 : i64} {
  func.func @_center_reg_mutex_kernel(%arg0: i32, %arg1: memref<8x32xf32, #tpu.memory_space<vmem>>, %arg2: memref<16x32xf32, #tpu.memory_space<vmem>>, %arg3: memref<1x16xf32, #tpu.memory_space<vmem>>, %arg4: memref<1x16xi32, #tpu.memory_space<vmem>>, %arg5: memref<1x1xf32, #tpu.memory_space<smem>>) attributes {dimension_semantics = [#tpu.dimension_semantics<arbitrary>], iteration_bounds = array<i64: 2>, scalar_prefetch = 0 : i64, scratch_operands = 0 : i64, tpu.core_type = #tpu.core_type<tc>, window_params = [{transform_indices = @transform_0, window_bounds = array<i64: 8, 32>}, {pipeline_mode = #tpu.pipeline_mode<synchronous>, transform_indices = @transform_1, window_bounds = array<i64: 16, 32>}, {pipeline_mode = #tpu.pipeline_mode<synchronous>, transform_indices = @transform_2, window_bounds = array<i64: 1, 16>}, {pipeline_mode = #tpu.pipeline_mode<synchronous>, transform_indices = @transform_3, window_bounds = array<i64: 1, 16>}, {transform_indices = @transform_4, window_bounds = array<i64: 1, 1>}]} {
    %c0_i32 = arith.constant 0 : i32
    %0 = arith.cmpi eq, %arg0, %c0_i32 : i32
    %1 = arith.extui %0 : i1 to i32
    %c0_i32_0 = arith.constant 0 : i32
    %2 = arith.cmpi ne, %1, %c0_i32_0 : i32
    scf.if %2 {
      %cst_20 = arith.constant 0.000000e+00 : f32
      %c0_21 = arith.constant 0 : index
      %c0_22 = arith.constant 0 : index
      %44 = memref.load %arg5[%c0_21, %c0_22] : memref<1x1xf32, #tpu.memory_space<smem>>
      memref.store %cst_20, %arg5[%c0_21, %c0_22] : memref<1x1xf32, #tpu.memory_space<smem>>
    } else {
    }
    %c0 = arith.constant 0 : index
    %c0_1 = arith.constant 0 : index
    %3 = vector.load %arg1[%c0, %c0_1] : memref<8x32xf32, #tpu.memory_space<vmem>>, vector<8x32xf32>
    %c0_2 = arith.constant 0 : index
    %c0_3 = arith.constant 0 : index
    %4 = vector.load %arg2[%c0_2, %c0_3] : memref<16x32xf32, #tpu.memory_space<vmem>>, vector<16x32xf32>
    %5 = arith.mulf %3, %3 : vector<8x32xf32>
    %cst = arith.constant dense<0.000000e+00> : vector<8xf32>
    %6 = vector.multi_reduction <add>, %5, %cst [1] : vector<8x32xf32> to vector<8xf32>
    %7 = vector.shape_cast %6 : vector<8xf32> to vector<8x1xf32>
    %cst_4 = arith.constant dense<0.000000e+00> : vector<8x16xf32>
    %8 = tpu.matmul %3, %4, %cst_4 {dimension_numbers = #tpu.dot_dimension_numbers<[1], [1], [0], [0], [0, 0, 1, 0], [], []>} : vector<8x32xf32>, vector<16x32xf32>, vector<8x16xf32> -> vector<8x16xf32>
    %c0_5 = arith.constant 0 : index
    %c0_6 = arith.constant 0 : index
    %9 = vector.load %arg3[%c0_5, %c0_6] : memref<1x16xf32, #tpu.memory_space<vmem>>, vector<1x16xf32>
    %10 = vector.broadcast %7 : vector<8x1xf32> to vector<8x16xf32>
    %11 = vector.broadcast %9 : vector<1x16xf32> to vector<8x16xf32>
    %12 = arith.addf %10, %11 : vector<8x16xf32>
    %cst_7 = arith.constant 2.000000e+00 : f32
    %13 = vector.broadcast %cst_7 : f32 to vector<8x16xf32>
    %14 = arith.mulf %13, %8 : vector<8x16xf32>
    %15 = arith.subf %12, %14 : vector<8x16xf32>
    %c0_8 = arith.constant 0 : index
    %c0_9 = arith.constant 0 : index
    %16 = vector.load %arg4[%c0_8, %c0_9] : memref<1x16xi32, #tpu.memory_space<vmem>>, vector<1x16xi32>
    %c0_i32_10 = arith.constant 0 : i32
    %17 = vector.broadcast %c0_i32_10 : i32 to vector<1x16xi32>
    %18 = arith.cmpi sgt, %16, %17 : vector<1x16xi32>
    %cst_11 = arith.constant 9.99999996E-13 : f32
    %cst_12 = arith.constant 9.99999995E+11 : f32
    %19 = vector.broadcast %cst_11 : f32 to vector<8x16xf32>
    %20 = arith.maximumf %19, %15 : vector<8x16xf32>
    %21 = vector.broadcast %cst_12 : f32 to vector<8x16xf32>
    %22 = arith.minimumf %21, %20 : vector<8x16xf32>
    %cst_13 = arith.constant 9.99999996E-13 : f32
    %23 = vector.shape_cast %18 : vector<1x16xi1> to vector<1x16xi1>
    %24 = vector.broadcast %23 : vector<1x16xi1> to vector<8x16xi1>
    %25 = vector.broadcast %cst_13 : f32 to vector<8x16xf32>
    %26 = arith.select %24, %22, %25 : vector<8x16xi1>, vector<8x16xf32>
    %c8_i32 = arith.constant 8 : i32
    %27 = arith.muli %arg0, %c8_i32 : i32
    %28 = tpu.iota {dimensions = array<i32: 0>} : vector<8x1xi32>
    %29 = vector.broadcast %27 : i32 to vector<8x1xi32>
    %30 = arith.addi %29, %28 : vector<8x1xi32>
    %c16_i32 = arith.constant 16 : i32
    %31 = vector.broadcast %c16_i32 : i32 to vector<8x1xi32>
    %32 = arith.cmpi slt, %30, %31 : vector<8x1xi32>
    %cst_14 = arith.constant 0.000000e+00 : f32
    %33 = vector.shape_cast %32 : vector<8x1xi1> to vector<8x1xi1>
    %34 = vector.broadcast %33 : vector<8x1xi1> to vector<8x16xi1>
    %35 = vector.broadcast %cst_14 : f32 to vector<8x16xf32>
    %36 = arith.select %34, %26, %35 : vector<8x16xi1>, vector<8x16xf32>
    %c0_15 = arith.constant 0 : index
    %c0_16 = arith.constant 0 : index
    %37 = memref.load %arg5[%c0_15, %c0_16] : memref<1x1xf32, #tpu.memory_space<smem>>
    %38 = vector.shape_cast %36 : vector<8x16xf32> to vector<1x8x16xf32>
    %cst_17 = arith.constant dense<0.000000e+00> : vector<1xf32>
    %39 = vector.multi_reduction <add>, %38, %cst_17 [1, 2] : vector<1x8x16xf32> to vector<1xf32>
    %40 = vector.shape_cast %39 : vector<1xf32> to vector<1x1x1xf32>
    %41 = vector.extract %40[0, 0, 0] : f32 from vector<1x1x1xf32>
    %42 = arith.addf %37, %41 : f32
    %c0_18 = arith.constant 0 : index
    %c0_19 = arith.constant 0 : index
    %43 = memref.load %arg5[%c0_18, %c0_19] : memref<1x1xf32, #tpu.memory_space<smem>>
    memref.store %42, %arg5[%c0_18, %c0_19] : memref<1x1xf32, #tpu.memory_space<smem>>
    return
  }
  func.func @transform_0(%arg0: i32) -> (i32, i32) {
    %c0_i32 = arith.constant 0 : i32
    %c0_i32_0 = arith.constant 0 : i32
    return %arg0, %c0_i32 : i32, i32
  }
  func.func @transform_1(%arg0: i32) -> (i32, i32) {
    %c0_i32 = arith.constant 0 : i32
    %c0_i32_0 = arith.constant 0 : i32
    %c0_i32_1 = arith.constant 0 : i32
    return %c0_i32, %c0_i32_0 : i32, i32
  }
  func.func @transform_2(%arg0: i32) -> (i32, i32) {
    %c0_i32 = arith.constant 0 : i32
    %c0_i32_0 = arith.constant 0 : i32
    %c0_i32_1 = arith.constant 0 : i32
    return %c0_i32, %c0_i32_0 : i32, i32
  }
  func.func @transform_3(%arg0: i32) -> (i32, i32) {
    %c0_i32 = arith.constant 0 : i32
    %c0_i32_0 = arith.constant 0 : i32
    %c0_i32_1 = arith.constant 0 : i32
    return %c0_i32, %c0_i32_0 : i32, i32
  }
  func.func @transform_4(%arg0: i32) -> (i32, i32) {
    %c0_i32 = arith.constant 0 : i32
    %c0_i32_0 = arith.constant 0 : i32
    %c0_i32_1 = arith.constant 0 : i32
    return %c0_i32, %c0_i32_0 : i32, i32
  }
}

</mosaic_0001>

<llo_original>
// kernel: tpu_custom_call.1
$region0: #{tpu_custom_call.1}
  #allocation0 [shape = 'u32[]', space=smem, size = 0x4, offset = 0x4, fixed_abs, tag = 'smem constant byte address 0x4 - core index']
  #allocation1 [shape = 'u32[144,128]{1,0:T(1,128)}', space=vmem, size = 0x12000, scoped, tag = 'internal scratch']
  %s0 = inlined_call_operand.hbm [shape: f32[16,32], index: 0, kind: input, shape index: {}]
  %s1 = inlined_call_operand.hbm [shape: f32[16,32], index: 1, kind: input, shape index: {}]
  %s2 = inlined_call_operand.vmem [shape: f32[1,16], index: 2, kind: input, shape index: {}]
  %s3 = inlined_call_operand.vmem [shape: s32[1,16], index: 3, kind: input, shape index: {}]
  %s4 = inlined_call_operand.hbm [shape: f32[1,1], index: 4, kind: output, shape index: {}]
  %s5 = sld [smem:[#allocation0]]
  $region61: #{tpu_custom_call.1} parent=0
    _
  %s7 = ssub.s32 1, %s5
  %s8 = scalar_select 0, %s7, %s5
  $region1: #{tpu_custom_call.1} parent=0
    #allocation2 [shape = 'u8[8192]{0}', space=vmem, size = 0x2000, scoped, tag = 'input window, operand 0']
    #allocation3 [shape = 's32[2]{0}', space=sflag, size = 0x8, scoped, tag = 'scoped memory for tpu_custom_call.1']
    #allocation4 [shape = 's32[2]{0}', space=sflag, size = 0x8, scoped, tag = 'scoped memory for tpu_custom_call.1']
    #allocation5 [shape = 'u8[8192]{0}', space=vmem, size = 0x2000, scoped, tag = 'input window, operand 1, single buffered']
    #allocation6 [shape = 's32[1]{0}', space=sflag, size = 0x4, scoped, tag = 'scoped memory for tpu_custom_call.1']
    #allocation7 [shape = 'u8[512]{0}', space=smem, size = 0x200, scoped, tag = 'output window, operand 0, single buffered']
    %9 = vsyncpa [#allocation3], 0
    %s10 = scalar_lea.sflag [#allocation3], 1
    %11 = vsyncpa %s10, 0
    %12 = vsyncpa [#allocation6], 0
    %13 = vsyncpa [#allocation4], 0
    loop: start=0, step=1, limit=4
    $region2: #{tpu_custom_call.1} parent=1 // loop_pre_header
      _
    $region3: #{tpu_custom_call.1} parent=1 // loop_header
      %s15 = sphi 0, %s19
      %p16 = scmp.ge.s32.totalorder %s15, 4
      %s25 = sphi 0, %s27
      %s28 = sphi 0, %s25
      %s29 = sphi 0, %s28
      %s45 = sphi 0, %s29
      %s49 = sphi 0, %s49
      %s51 = sphi 0, %s49
      %s52 = sphi 0, %s51
      %s66 = sphi 0, %s52
      %s70 = sphi 0, %s70
      %s72 = sphi 0, %s70
      %s73 = sphi 0, %s72
      %s87 = sphi 0, %s73
      %s91 = sphi 0, %s91
      %s93 = sphi 0, %s91
      %s94 = sphi 0, %s93
      %s108 = sphi 0, %s94
      %s112 = sphi 0, %s112
      %s114 = sphi 0, %s112
      %s115 = sphi 0, %s114
      %s129 = sphi 0, %s115
    $region4: #{tpu_custom_call.1} parent=1 // loop_header_branch
      %18 = sbr.rel (%p16) target = $region8
    $region5: #{tpu_custom_call.1} parent=1 // loop_body
      %s20 = ssub.s32 %s15, 1
      %s21 = ssub.s32 %s15, 2
      %s22 = sadd.s32 %s15, 1
      %s23 = ssub.s32 %s15, %s22
      %p24 = scmp.eq.s32.totalorder %s23, 0
      %s26 = sadd.s32 %s25, 1
      %s27 = scalar_select %p24, %s25, %s26
      %p30 = pneg %p24
      %p31 = scmp.eq.s32.totalorder %s15, 1
      %p32 = por %p30, %p31
      %p33 = scmp.ne.s32.totalorder %s25, %s28
      %p34 = scmp.eq.s32.totalorder %s15, 0
      %p35 = por %p33, %p34
      %p36 = scmp.ne.s32.totalorder %s25, %s28
      %p37 = scmp.eq.s32.totalorder %s20, 1
      %p38 = por %p36, %p37
      %p39 = scmp.ne.s32.totalorder %s28, %s29
      %p40 = scmp.eq.s32.totalorder %s20, 0
      %p41 = por %p39, %p40
      %p42 = scmp.ne.s32.totalorder %s28, %s29
      %p43 = scmp.eq.s32.totalorder %s21, 1
      %p44 = por %p42, %p43
      %p46 = scmp.ne.s32.totalorder %s29, %s45
      %p47 = scmp.eq.s32.totalorder %s21, 0
      %p48 = por %p46, %p47
      %s50 = sadd.s32 %s49, 1
      %p53 = scmp.eq.s32.totalorder %s15, 1
      %p54 = scmp.ne.s32.totalorder %s49, %s51
      %p55 = scmp.eq.s32.totalorder %s15, 0
      %p56 = por %p54, %p55
      %p57 = scmp.ne.s32.totalorder %s49, %s51
      %p58 = scmp.eq.s32.totalorder %s20, 1
      %p59 = por %p57, %p58
      %p60 = scmp.ne.s32.totalorder %s51, %s52
      %p61 = scmp.eq.s32.totalorder %s20, 0
      %p62 = por %p60, %p61
      %p63 = scmp.ne.s32.totalorder %s51, %s52
      %p64 = scmp.eq.s32.totalorder %s21, 1
      %p65 = por %p63, %p64
      %p67 = scmp.ne.s32.totalorder %s52, %s66
      %p68 = scmp.eq.s32.totalorder %s21, 0
      %p69 = por %p67, %p68
      %s71 = sadd.s32 %s70, 1
      %p74 = scmp.eq.s32.totalorder %s15, 1
      %p75 = scmp.ne.s32.totalorder %s70, %s72
      %p76 = scmp.eq.s32.totalorder %s15, 0
      %p77 = por %p75, %p76
      %p78 = scmp.ne.s32.totalorder %s70, %s72
      %p79 = scmp.eq.s32.totalorder %s20, 1
      %p80 = por %p78, %p79
      %p81 = scmp.ne.s32.totalorder %s72, %s73
      %p82 = scmp.eq.s32.totalorder %s20, 0
      %p83 = por %p81, %p82
      %p84 = scmp.ne.s32.totalorder %s72, %s73
      %p85 = scmp.eq.s32.totalorder %s21, 1
      %p86 = por %p84, %p85
      %p88 = scmp.ne.s32.totalorder %s73, %s87
      %p89 = scmp.eq.s32.totalorder %s21, 0
      %p90 = por %p88, %p89
      %s92 = sadd.s32 %s91, 1
      %p95 = scmp.eq.s32.totalorder %s15, 1
      %p96 = scmp.ne.s32.totalorder %s91, %s93
      %p97 = scmp.eq.s32.totalorder %s15, 0
      %p98 = por %p96, %p97
      %p99 = scmp.ne.s32.totalorder %s91, %s93
      %p100 = scmp.eq.s32.totalorder %s20, 1
      %p101 = por %p99, %p100
      %p102 = scmp.ne.s32.totalorder %s93, %s94
      %p103 = scmp.eq.s32.totalorder %s20, 0
      %p104 = por %p102, %p103
      %p105 = scmp.ne.s32.totalorder %s93, %s94
      %p106 = scmp.eq.s32.totalorder %s21, 1
      %p107 = por %p105, %p106
      %p109 = scmp.ne.s32.totalorder %s94, %s108
      %p110 = scmp.eq.s32.totalorder %s21, 0
      %p111 = por %p109, %p110
      %s113 = sadd.s32 %s112, 1
      %p116 = scmp.eq.s32.totalorder %s15, 1
      %p117 = scmp.ne.s32.totalorder %s112, %s114
      %p118 = scmp.eq.s32.totalorder %s15, 0
      %p119 = por %p117, %p118
      %p120 = scmp.ne.s32.totalorder %s112, %s114
      %p121 = scmp.eq.s32.totalorder %s20, 1
      %p122 = por %p120, %p121
      %p123 = scmp.ne.s32.totalorder %s114, %s115
      %p124 = scmp.eq.s32.totalorder %s20, 0
      %p125 = por %p123, %p124
      %p126 = scmp.ne.s32.totalorder %s114, %s115
      %p127 = scmp.eq.s32.totalorder %s21, 1
      %p128 = por %p126, %p127
      %p130 = scmp.ne.s32.totalorder %s115, %s129
      %p131 = scmp.eq.s32.totalorder %s21, 0
      %p132 = por %p130, %p131
      %p133 = scmp.le.s32.totalorder 1, %s15
      %p134 = scmp.lt.s32.totalorder %s15, 3
      %p135 = pnand %p133, %p134
      %p136 = pneg %p135
      // Predicated region
      $region9: #{tpu_custom_call.1} parent=5 // pred_check
        _
      $region10: #{tpu_custom_call.1} parent=5 // pred_check_branch
        %138 = sbr.rel (%p135) target = $region12
      $region11: #{tpu_custom_call.1} parent=5 // pred_region
        %s139 = ssub.s32 %s15, 1
        // Predicated region
        $region13: #{tpu_custom_call.1} parent=11 // pred_check
          %p140 = pneg %p62
        $region14: #{tpu_custom_call.1} parent=11 // pred_check_branch
          %142 = sbr.rel (%p140) target = $region16
        $region15: #{tpu_custom_call.1} parent=11 // pred_region
          %s144 = ssub.s32 256, 256
          %145 = vsyncadd [#allocation6], %s144
          %s146 = sshll.u32 [#allocation5], 4
          %s147 = int_to_ptr.vmem [resolvable:$true] %s146
          %152 = dma.hbm_to_vmem [thread:$0]  %s1, 256, %s147, [#allocation6], 128, 128, 8
        $region16: #{tpu_custom_call.1} parent=11 // pred_fallthru
          _
        // Predicated region
        $region17: #{tpu_custom_call.1} parent=11 // pred_check
          %p153 = pneg %p83
        $region18: #{tpu_custom_call.1} parent=11 // pred_check_branch
          %155 = sbr.rel (%p153) target = $region20
        $region19: #{tpu_custom_call.1} parent=11 // pred_region
          _
        $region20: #{tpu_custom_call.1} parent=11 // pred_fallthru
          _
        // Predicated region
        $region21: #{tpu_custom_call.1} parent=11 // pred_check
          %p156 = pneg %p104
        $region22: #{tpu_custom_call.1} parent=11 // pred_check_branch
          %158 = sbr.rel (%p156) target = $region24
        $region23: #{tpu_custom_call.1} parent=11 // pred_region
          _
        $region24: #{tpu_custom_call.1} parent=11 // pred_fallthru
          _
      $region12: #{tpu_custom_call.1} parent=5 // pred_fallthru
        _
      %p159 = scmp.lt.s32.totalorder %s15, 2
      // Predicated region
      $region25: #{tpu_custom_call.1} parent=5 // pred_check
        %p160 = pneg %p159
      $region26: #{tpu_custom_call.1} parent=5 // pred_check_branch
        %162 = sbr.rel (%p160) target = $region28
      $region27: #{tpu_custom_call.1} parent=5 // pred_region
        // Predicated region
        $region29: #{tpu_custom_call.1} parent=27 // pred_check
          %p163 = pneg %p35
        $region30: #{tpu_custom_call.1} parent=27 // pred_check_branch
          %165 = sbr.rel (%p163) target = $region32
        $region31: #{tpu_custom_call.1} parent=27 // pred_region
          %s166 = sand.u32 %s25, 1
          %s167 = scalar_lea.sflag [#allocation3], %s166
          %s168 = sand.u32 %s25, 1
          %s169 = smul.addr %s168, 8
          %s170 = scalar_lea.vmem [#allocation2], %s169
          %s172 = ssub.s32 128, 128
          %173 = vsyncadd %s167, %s172
          %s174 = smul.addr %s15, 128
          %s175 = scalar_lea.hbm %s0, %s174
          %s177 = sshll.u32 %s170, 4
          %s178 = int_to_ptr.vmem [resolvable:$true] %s177
          %180 = dma.hbm_to_vmem [thread:$0]  %s175, 128, %s178, %s167
        $region32: #{tpu_custom_call.1} parent=27 // pred_fallthru
          _
      $region28: #{tpu_custom_call.1} parent=5 // pred_fallthru
        _
      %p181 = scmp.le.s32.totalorder 1, %s15
      %p182 = scmp.lt.s32.totalorder %s15, 3
      %p183 = pnand %p181, %p182
      %p184 = pneg %p183
      // Predicated region
      $region33: #{tpu_custom_call.1} parent=5 // pred_check
        _
      $region34: #{tpu_custom_call.1} parent=5 // pred_check_branch
        %186 = sbr.rel (%p183) target = $region36
      $region35: #{tpu_custom_call.1} parent=5 // pred_region
        %s187 = ssub.s32 %s15, 1
        %s188 = sand.u32 %s28, 1
        %s189 = scalar_lea.sflag [#allocation3], %s188
        %s190 = sand.u32 %s28, 1
        %s191 = smul.addr %s190, 8
        %s192 = scalar_lea.vmem [#allocation2], %s191
        // Predicated region
        $region37: #{tpu_custom_call.1} parent=35 // pred_check
          %p193 = pneg %p41
        $region38: #{tpu_custom_call.1} parent=35 // pred_check_branch
          %195 = sbr.rel (%p193) target = $region40
        $region39: #{tpu_custom_call.1} parent=35 // pred_region
          %196 = dma.done %s189, 128
        $region40: #{tpu_custom_call.1} parent=35 // pred_fallthru
          _
        // Predicated region
        $region41: #{tpu_custom_call.1} parent=35 // pred_check
          %p197 = pneg %p62
        $region42: #{tpu_custom_call.1} parent=35 // pred_check_branch
          %199 = sbr.rel (%p197) target = $region44
        $region43: #{tpu_custom_call.1} parent=35 // pred_region
          %200 = dma.done [#allocation6], 256
        $region44: #{tpu_custom_call.1} parent=35 // pred_fallthru
          _
        %s201 = sand.u32 %s28, 1
        %s202 = scalar_lea.sflag [#allocation3], %s201
        %s203 = sand.u32 %s28, 1
        %s204 = smul.addr %s203, 8
        %s205 = scalar_lea.vmem [#allocation2], %s204
        %p206 = pneg %p41
        %p207 = pneg %p38
        %p208 = pneg %p62
        %p209 = pneg %p59
        %p210 = pneg %p83
        %p211 = pneg %p80
        %p212 = pneg %p104
        %p213 = pneg %p101
        %p214 = pneg %p125
        %p215 = pneg %p122
        %p216 = scmp.eq.s32.totalorder %s20, 0
        // Predicated region
        $region45: #{tpu_custom_call.1} parent=35 // pred_check
          %p217 = pneg %p216
        $region46: #{tpu_custom_call.1} parent=35 // pred_check_branch
          %219 = sbr.rel (%p217) target = $region48
        $region47: #{tpu_custom_call.1} parent=35 // pred_region
          %s220 = scalar_lea.smem [#allocation7], 0
          %221 = sst [smem:[%s220]] 0.0
        $region48: #{tpu_custom_call.1} parent=35 // pred_fallthru
          _
        %v222 = vld [vmem:[%s192] sm:$0xff]
        %v223 = vld [vmem:[#allocation5] sm:$0xff]
        %v224 = vld [vmem:[#allocation5 + $0x8] sm:$0xff]
        %v225 = vmul.f32 %v222, %v222
        %vm226 = vcmask 261120
        %v227 = vsel %vm226, %v225, 0.0
        %228 = vadd.xlane.f32.xlu0 %v227
        %v229 = vpop.xlane.xlu0 %228
        %v231 = vsel %vm226, %v222, 0
        %v234 = vsel %vm226, %v223, 0
        %v237 = vsel %vm226, %v224, 0
        %239 = vmatprep.subr.mxu0 0.0
        %240 = vmatpush1.xpose.msra.mxu0 0.0
        %241 = vmatprep.subr.mxu0 0.0
        %242 = vmatpush1.xpose.msra.mxu0 0.0
        %243 = vmatprep.subr.mxu0 0.0
        %244 = vmatpush1.xpose.msra.mxu0 0.0
        %245 = vmatprep.subr.mxu0 0.0
        %246 = vmatpush1.xpose.msra.mxu0 0.0
        %247 = vmatprep.subr.mxu0 0.0
        %248 = vmatpush1.xpose.msra.mxu0 0.0
        %249 = vmatprep.subr.mxu0 0.0
        %250 = vmatpush1.xpose.msra.mxu0 0.0
        %251 = vmatprep.subr.mxu0 0.0
        %252 = vmatpush1.xpose.msra.mxu0 0.0
        %253 = vmatprep.subr.mxu0 0.0
        %254 = vmatpush1.xpose.msra.mxu0 0.0
        %255 = vmatprep.subr.mxu0 0.0
        %256 = vmatpush1.xpose.msra.mxu0 0.0
        %257 = vmatprep.subr.mxu0 0.0
        %258 = vmatpush1.xpose.msra.mxu0 0.0
        %259 = vmatprep.subr.mxu0 0.0
        %260 = vmatpush1.xpose.msra.mxu0 0.0
        %261 = vmatprep.subr.mxu0 0.0
        %262 = vmatpush1.xpose.msra.mxu0 0.0
        %263 = vmatprep.subr.mxu0 0.0
        %264 = vmatpush1.xpose.msra.mxu0 0.0
        %265 = vmatprep.subr.mxu0 0.0
        %266 = vmatpush1.xpose.msra.mxu0 0.0
        %267 = vmatprep.subr.mxu0 0.0
        %268 = vmatpush1.xpose.msra.mxu0 %v237
        %269 = vmatprep.subr.mxu0 0.0
        %270 = vmatpush1.xpose.msra.mxu0 %v234
        %271 = vmatprep.subr.mxu0 0.0
        %272 = vmatpush2.xpose.msra.mxu0 0.0
        %273 = vmatprep.subr.mxu0 0.0
        %274 = vmatpush2.xpose.msra.mxu0 0.0
        %275 = vmatprep.subr.mxu0 0.0
        %276 = vmatpush2.xpose.msra.mxu0 0.0
        %277 = vmatprep.subr.mxu0 0.0
        %278 = vmatpush2.xpose.msra.mxu0 0.0
        %279 = vmatprep.subr.mxu0 0.0
        %280 = vmatpush2.xpose.msra.mxu0 0.0
        %281 = vmatprep.subr.mxu0 0.0
        %282 = vmatpush2.xpose.msra.mxu0 0.0
        %283 = vmatprep.subr.mxu0 0.0
        %284 = vmatpush2.xpose.msra.mxu0 0.0
        %285 = vmatprep.subr.mxu0 0.0
        %286 = vmatpush2.xpose.msra.mxu0 0.0
        %287 = vmatprep.subr.mxu0 0.0
        %288 = vmatpush2.xpose.msra.mxu0 0.0
        %289 = vmatprep.subr.mxu0 0.0
        %290 = vmatpush2.xpose.msra.mxu0 0.0
        %291 = vmatprep.subr.mxu0 0.0
        %292 = vmatpush2.xpose.msra.mxu0 0.0
        %293 = vmatprep.subr.mxu0 0.0
        %294 = vmatpush2.xpose.msra.mxu0 0.0
        %295 = vmatprep.subr.mxu0 0.0
        %296 = vmatpush2.xpose.msra.mxu0 0.0
        %297 = vmatprep.subr.mxu0 0.0
        %298 = vmatpush2.xpose.msra.mxu0 0.0
        %299 = vmatprep.subr.mxu0 0.0
        %300 = vmatpush2.xpose.msra.mxu0 0.0
        %301 = vmatprep.subr.mxu0 0.0
        %302 = vmatpush2.xpose.msra.mxu0 0.0
        %303 = vmatprep.mubr.f32.mxu0 0.0
        %304 = vmatmul.mubr.f32.gmra.mxu0 %v231
        %v305 = vpop.f32.mrf.mxu0
        %v306 = vadd.f32 0.0, %v305
        %v307 = vpop.f32.mrf.mxu0
        %308 = vdwg.mxu0
        %v309 = vld [vmem:[%s2] sm:$0x1]
        %v311 = vlaneseq
        %v312 = vshrl.u32 %v311, 7
        %v313 = vsub.s32 0, %v312
        %v314 = vrot.slane %v309, %v313
        %v316 = vadd.f32 %v229, %v314
        %v317 = vmul.f32 %v306, 2.0
        %v318 = vsub.f32 %v316, %v317
        %v319 = vld [vmem:[%s3] sm:$0x1]
        %vm320 = vcmp.gt.s32.totalorder %v319, 0
        %v321 = vmax.f32 %v318, 1e-12
        %v322 = vmin.f32 %v321, 1e+12
        %v323 = vsel %vm320, 1, 0
        %v324 = vlaneseq
        %v325 = vshrl.u32 %v324, 7
        %v326 = vsub.s32 0, %v325
        %v327 = vrot.slane %v323, %v326
        %vm328 = vcmp.eq.s32.totalorder %v327, 1
        %v329 = vsel %vm328, %v322, 1e-12
        %s330 = smul.u32 %s20, 8
        %v331 = vlaneseq
        %v332 = vshrl.u32 %v331, 7
        %v333 = vstv %s330
        %v334 = vadd.s32 %v333, %v332
        %vm335 = vcmp.lt.s32.totalorder %v334, 16
        %v336 = vsel %vm335, 1, 0
        %vm337 = vcmp.eq.s32.totalorder %v336, 1
        %v338 = vsel %vm337, %v329, 0.0
        %s339 = sld [smem:[#allocation7]]
        %vm340 = vcmask 130048
        %v341 = vsel %vm340, %v338, 0.0
        %342 = vadd.xlane.f32.xlu0 %v341
        %v343 = vpop.xlane.xlu0 %342
        %v344 = vrot.slane %v343, 4
        %v345 = vadd.f32 %v343, %v344
        %v346 = vrot.slane %v345, 2
        %v347 = vadd.f32 %v345, %v346
        %v348 = vrot.slane %v347, 1
        %v349 = vadd.f32 %v347, %v348
        %s350 = vtos %v349
        %s351 = sadd.f32 %s339, %s350
        %s352 = scalar_lea.smem [#allocation7], 0
        %353 = sst [smem:[%s352]] %s351
        // Predicated region
        $region49: #{tpu_custom_call.1} parent=35 // pred_check
          %p354 = pneg %p122
        $region50: #{tpu_custom_call.1} parent=35 // pred_check_branch
          %356 = sbr.rel (%p354) target = $region52
        $region51: #{tpu_custom_call.1} parent=35 // pred_region
          %s358 = ssub.s32 16, 16
          %359 = vsyncadd [#allocation4], %s358
          %362 = dma.smem_to_hbm [#allocation7], 16, %s4, [#allocation4]
        $region52: #{tpu_custom_call.1} parent=35 // pred_fallthru
          _
        // Predicated region
        $region53: #{tpu_custom_call.1} parent=35 // pred_check
          %p363 = pneg %p122
        $region54: #{tpu_custom_call.1} parent=35 // pred_check_branch
          %365 = sbr.rel (%p363) target = $region56
        $region55: #{tpu_custom_call.1} parent=35 // pred_region
          %366 = dma.done [#allocation4], 16
        $region56: #{tpu_custom_call.1} parent=35 // pred_fallthru
          _
        %367 = sfence
      $region36: #{tpu_custom_call.1} parent=5 // pred_fallthru
        _
      %p368 = scmp.le.s32.totalorder 2, %s15
      // Predicated region
      $region57: #{tpu_custom_call.1} parent=5 // pred_check
        %p369 = pneg %p368
      $region58: #{tpu_custom_call.1} parent=5 // pred_check_branch
        %371 = sbr.rel (%p369) target = $region60
      $region59: #{tpu_custom_call.1} parent=5 // pred_region
        %s372 = ssub.s32 %s15, 2
      $region60: #{tpu_custom_call.1} parent=5 // pred_fallthru
        _
    $region6: #{tpu_custom_call.1} parent=1 // loop_footer
      %s19 = sadd.s32 1, %s15
    $region7: #{tpu_custom_call.1} parent=1 // loop_footer_branch
      %14 = sbr.rel target = $region3
    $region8: #{tpu_custom_call.1} parent=1 // loop_exit
      _
    %373 = vsyncpa [#allocation3], 1
    %s374 = scalar_lea.sflag [#allocation3], 1
    %375 = vsyncpa %s374, 1
    %376 = vsyncpa [#allocation6], 1
    %377 = vsyncpa [#allocation4], 1
    %s378 = scalar_lea.sflag [#allocation4], 1
    %379 = vsyncpa %s378, 1

</llo_original>
